<compile_context>
chip_gen: v5e
topology: v5e:2x2
jax: 0.10.0
libtpu: 0.0.40
codegen_flags: <defaults>
</compile_context>

<pallas_src>
import jax
import jax.numpy as jnp
from jax.experimental import pallas as pl
from jax.experimental.pallas import tpu as pltpu

LANE = 128
SUBLANE = 8
TARGET_TILE_BYTES = 4 * 1024 * 1024    # per-input per-step tile (f32: 8192 rows)
CHUNK_ROWS = 128                       # fused-pass chunk (16 vregs/input live)
VMEM_LIMIT_BYTES = 32 * 1024 * 1024    # 2 inputs x 2 bufs x 4 MiB = 16 MiB + headroom


def _sublane_align(dtype):
    itemsize = jnp.dtype(dtype).itemsize
    return SUBLANE * max(1, 4 // itemsize)   # f32 -> 8, bf16 -> 16, int8 -> 32


def _two_tensorcore_chip():
    """True on chips with 2 TensorCores (v7x); CORE_PARALLEL is only useful there."""
    try:
        kind = jax.devices()[0].device_kind.lower()
    except Exception:
        return False
    return any(tag in kind for tag in ("v7", "tpu7", "7x"))


def _make_cc_stats_kernel(tile_rows, chunk_rows, rows2d, steps):
    """Kernel accumulating 5 partial-sum slabs into a revisited (1,5,8,128) block."""
    n_chunks = tile_rows // chunk_rows

    def kernel(s_ref, g_ref, o_ref):
        c = pl.program_id(0)
        i = pl.program_id(1)

        @pl.when(i == 0)
        def _():
            o_ref[...] = jnp.zeros_like(o_ref)

        # Number of valid rows in this block (static constants baked in; may be
        # > tile_rows for interior blocks, <= 0 for phantom blocks of the last
        # shard when the block count is odd).
        valid_rows = rows2d - (c * steps + i) * tile_rows

        def accumulate(masked):
            def body(k, acc):
                off = pl.multiple_of(k * chunk_rows, chunk_rows)
                s = s_ref[pl.ds(off, chunk_rows), :].astype(jnp.float32)
                g = g_ref[pl.ds(off, chunk_rows), :].astype(jnp.float32)
                if masked:
                    row = jax.lax.broadcasted_iota(
                        jnp.int32, (chunk_rows, LANE), 0) + off
                    keep = row < valid_rows
                    # Mask BEFORE squaring so stale DMA padding (possibly NaN)
                    # cannot reach the products.
                    s = jnp.where(keep, s, 0.0)
                    g = jnp.where(keep, g, 0.0)
                s3 = s.reshape(-1, SUBLANE, LANE)
                g3 = g.reshape(-1, SUBLANE, LANE)
                a0, a1, a2, a3, a4 = acc
                return (a0 + jnp.sum(s3, axis=0),
                        a1 + jnp.sum(g3, axis=0),
                        a2 + jnp.sum(s3 * s3, axis=0),
                        a3 + jnp.sum(g3 * g3, axis=0),
                        a4 + jnp.sum(s3 * g3, axis=0))

            zero = jnp.zeros((SUBLANE, LANE), jnp.float32)
            acc = jax.lax.fori_loop(0, n_chunks, body,
                                    (zero, zero, zero, zero, zero),
                                    unroll=min(4, n_chunks))
            o_ref[0, 0] += acc[0]
            o_ref[0, 1] += acc[1]
            o_ref[0, 2] += acc[2]
            o_ref[0, 3] += acc[3]
            o_ref[0, 4] += acc[4]

        # Fast (unmasked) path for fully-valid blocks; masked path only for the
        # ragged last block / phantom blocks, so the common path pays zero mask cost.
        @pl.when(valid_rows >= tile_rows)
        def _():
            accumulate(masked=False)

        @pl.when(valid_rows < tile_rows)
        def _():
            accumulate(masked=True)

    return kernel


def _cc_stats_pallas(s2d, g2d, *, rows2d, tile_rows, num_shards, steps,
                     total_blocks, core_parallel):
    assert s2d.shape == (rows2d, LANE) and g2d.shape == (rows2d, LANE)

    # Chunk must divide tile_rows; tile_rows is a multiple of 8, so this always
    # lands on a power-of-two >= 8 (>= 16 for bf16-aligned tiles).
    chunk_rows = CHUNK_ROWS
    while tile_rows % chunk_rows:
        chunk_rows //= 2

    if num_shards * steps == total_blocks:
        def block_index(c, i):
            return (c * steps + i, 0)
    else:
        # Odd block count split across 2 shards: clamp phantom blocks onto the
        # last real block (their contribution is zeroed by the in-kernel mask).
        def block_index(c, i):
            return (jnp.minimum(c * steps + i, total_blocks - 1), 0)

    in_spec = pl.BlockSpec((tile_rows, LANE), block_index)

    first_sem = pltpu.PARALLEL
    if core_parallel:
        first_sem = getattr(pltpu, "CORE_PARALLEL", pltpu.PARALLEL)

    bytes_in = s2d.size * s2d.dtype.itemsize + g2d.size * g2d.dtype.itemsize
    cost = pl.CostEstimate(
        flops=8 * s2d.size,                      # 3 muls + 5 adds per element
        transcendentals=0,
        bytes_accessed=bytes_in + num_shards * 5 * SUBLANE * LANE * 4,
    )

    kernel = _make_cc_stats_kernel(tile_rows, chunk_rows, rows2d, steps)

    stats = pl.pallas_call(
        kernel,
        out_shape=jax.ShapeDtypeStruct((num_shards, 5, SUBLANE, LANE), jnp.float32),
        grid_spec=pltpu.PrefetchScalarGridSpec(
            num_scalar_prefetch=0,
            grid=(num_shards, steps),
            in_specs=[in_spec, in_spec],
            out_specs=pl.BlockSpec((1, 5, SUBLANE, LANE),
                                   lambda c, i: (c, 0, 0, 0)),
        ),
        compiler_params=pltpu.CompilerParams(
            dimension_semantics=(first_sem, pltpu.ARBITRARY),
            vmem_limit_bytes=VMEM_LIMIT_BYTES,
        ),
        cost_estimate=cost,
    )(s2d, g2d)

    return jnp.sum(stats, axis=(0, 2, 3))    # (5,) global sums


def cc_loss(saliency_map, gtruth):
    """Pearson CC between two tensors (global reductions); bulk work in Pallas."""
    assert saliency_map.shape == gtruth.shape
    s_flat = saliency_map.reshape(-1)
    g_flat = gtruth.reshape(-1)
    n_total = s_flat.shape[0]

    align = max(_sublane_align(s_flat.dtype), _sublane_align(g_flat.dtype))
    max_itemsize = max(jnp.dtype(s_flat.dtype).itemsize,
                       jnp.dtype(g_flat.dtype).itemsize)
    target_rows = max(align,
                      (TARGET_TILE_BYTES // (LANE * max_itemsize)) // align * align)

    rows2d = n_total // LANE
    main_elems = rows2d * LANE

    sums = jnp.zeros((5,), jnp.float32)
    kernel_elems = 0
    if rows2d >= align:
        tile_rows = min(target_rows, (rows2d // align) * align)
        total_blocks = -(-rows2d // tile_rows)            # ceil
        use_cp = total_blocks >= 2 and _two_tensorcore_chip()
        num_shards = 2 if use_cp else 1
        steps = -(-total_blocks // num_shards)            # ceil

        if main_elems == n_total:
            s_main, g_main = s_flat, g_flat               # free reshape, no copy
        else:
            # TODO(synk): when n_total % 128 != 0 this slice copies the bulk once;
            # a fully 1-D blocked kernel with element-level masking would avoid it.
            s_main, g_main = s_flat[:main_elems], g_flat[:main_elems]
        s2d = s_main.reshape(rows2d, LANE)
        g2d = g_main.reshape(rows2d, LANE)

        kwargs = dict(rows2d=rows2d, tile_rows=tile_rows, num_shards=num_shards,
                      steps=steps, total_blocks=total_blocks)
        try:
            sums = _cc_stats_pallas(s2d, g2d, core_parallel=use_cp, **kwargs)
        except Exception:
            if not use_cp:
                raise
            sums = _cc_stats_pallas(s2d, g2d, core_parallel=False, **kwargs)
        kernel_elems = main_elems

    if kernel_elems < n_total:
        # Only the <128-element remainder (shapes not divisible by LANE) or
        # inputs too small for a single aligned tile land here.
        rs = s_flat[kernel_elems:].astype(jnp.float32)
        rg = g_flat[kernel_elems:].astype(jnp.float32)
        sums = sums + jnp.stack([jnp.sum(rs), jnp.sum(rg), jnp.sum(rs * rs),
                                 jnp.sum(rg * rg), jnp.sum(rs * rg)])

    # Scalar epilogue: combine raw sums -> Pearson CC.
    # NOTE: one-pass variance (sum_sq - n*mean^2) can lose precision when
    # |mean| >> std at very large N; matches the naive reference for typical inputs.
    n = jnp.float32(n_total)
    sum_s, sum_g = sums[0], sums[1]
    sum_ss, sum_gg, sum_sg = sums[2], sums[3], sums[4]
    mean_s = sum_s / n
    mean_g = sum_g / n
    num = sum_sg - n * mean_s * mean_g
    var_s = sum_ss - n * mean_s * mean_s
    var_g = sum_gg - n * mean_g * mean_g
    return num / (jnp.sqrt(var_s) * jnp.sqrt(var_g))


def cc_loss_ref(saliency_map, gtruth):
    s = saliency_map.astype(jnp.float32)
    g = gtruth.astype(jnp.float32)
    s = s - s.mean()
    g = g - g.mean()
    return jnp.sum(s * g) / (jnp.sqrt(jnp.sum(s * s)) * jnp.sqrt(jnp.sum(g * g)))


if __name__ == "__main__":
    key = jax.random.PRNGKey(0)
    k1, k2, k3, k4, k5, k6 = jax.random.split(key, 6)

    # Primary test: NCHW inputs, batch=2, channels=4, spatial=16x16.
    saliency_map = jax.random.uniform(k1, (2, 4, 16, 16), dtype=jnp.float32)
    gtruth = jax.random.uniform(k2, (2, 4, 16, 16), dtype=jnp.float32)
    result = cc_loss(saliency_map, gtruth)
    jax.block_until_ready(result)
    expected = cc_loss_ref(saliency_map, gtruth)
    assert jnp.allclose(result, expected, atol=1e-5, rtol=1e-5), (
        f"mismatch: {result} vs {expected}"
    )

    # Ragged shape: exercises the in-kernel masked last block + <128-elem tail.
    s_odd = jax.random.uniform(k3, (1, 3, 17, 23), dtype=jnp.float32)
    g_odd = jax.random.uniform(k4, (1, 3, 17, 23), dtype=jnp.float32)
    r_odd = cc_loss(s_odd, g_odd)
    jax.block_until_ready(r_odd)
    e_odd = cc_loss_ref(s_odd, g_odd)
    assert jnp.allclose(r_odd, e_odd, atol=1e-5, rtol=1e-5), (
        f"mismatch (odd shape): {r_odd} vs {e_odd}"
    )

    # Multi-block shape whose last block is partial (1 valid row of 384): masked path.
    s_big = jax.random.uniform(k5, (1, 5, 77, 128), dtype=jnp.float32)
    g_big = jax.random.uniform(k6, (1, 5, 77, 128), dtype=jnp.float32)
    r_big = cc_loss(s_big, g_big)
    jax.block_until_ready(r_big)
    e_big = cc_loss_ref(s_big, g_big)
    assert jnp.allclose(r_big, e_big, atol=1e-5, rtol=1e-5), (
        f"mismatch (multi-block): {r_big} vs {e_big}"
    )

    print("KERNEL_OK")
</pallas_src>

<mosaic_0001>
module attributes {stable_mosaic.version = 11 : i64} {
  func.func @kernel(%arg0: i32, %arg1: i32, %arg2: memref<16x128xf32, #tpu.memory_space<vmem>>, %arg3: memref<16x128xf32, #tpu.memory_space<vmem>>, %arg4: memref<1x5x8x128xf32, #tpu.memory_space<vmem>>) attributes {dimension_semantics = [#tpu.dimension_semantics<parallel>, #tpu.dimension_semantics<arbitrary>], iteration_bounds = array<i64: 1, 1>, scalar_prefetch = 0 : i64, scratch_operands = 0 : i64, tpu.core_type = #tpu.core_type<tc>, window_params = [{transform_indices = @transform_0, window_bounds = array<i64: 16, 128>}, {transform_indices = @transform_1, window_bounds = array<i64: 16, 128>}, {transform_indices = @transform_2, window_bounds = array<i64: 1, 5, 8, 128>}]} {
    %c0_i32 = arith.constant 0 : i32
    %0 = arith.cmpi eq, %arg1, %c0_i32 : i32
    %1 = arith.extui %0 : i1 to i32
    %c0_i32_0 = arith.constant 0 : i32
    %2 = arith.cmpi ne, %1, %c0_i32_0 : i32
    scf.if %2 {
      %cst = arith.constant 0.000000e+00 : f32
      %13 = vector.broadcast %cst : f32 to vector<1x5x8x128xf32>
      %c0 = arith.constant 0 : index
      %c0_6 = arith.constant 0 : index
      %c0_7 = arith.constant 0 : index
      %c0_8 = arith.constant 0 : index
      %14 = vector.load %arg4[%c0, %c0_6, %c0_7, %c0_8] : memref<1x5x8x128xf32, #tpu.memory_space<vmem>>, vector<1x5x8x128xf32>
      tpu.vector_store %arg4[%c0, %c0_6, %c0_7, %c0_8], %13 {strides = array<i32>} : memref<1x5x8x128xf32, #tpu.memory_space<vmem>>, vector<1x5x8x128xf32>,
    } else {
    }
    %c1_i32 = arith.constant 1 : i32
    %3 = arith.muli %arg0, %c1_i32 : i32
    %4 = arith.addi %3, %arg1 : i32
    %c16_i32 = arith.constant 16 : i32
    %5 = arith.muli %4, %c16_i32 : i32
    %c16_i32_1 = arith.constant 16 : i32
    %6 = arith.subi %c16_i32_1, %5 : i32
    %c16_i32_2 = arith.constant 16 : i32
    %7 = arith.cmpi sge, %6, %c16_i32_2 : i32
    %8 = arith.extui %7 : i1 to i32
    %c0_i32_3 = arith.constant 0 : i32
    %9 = arith.cmpi ne, %8, %c0_i32_3 : i32
    scf.if %9 {
      %cst = arith.constant 0.000000e+00 : f32
      %13 = vector.broadcast %cst : f32 to vector<8x128xf32>
      %c0_i32_6 = arith.constant 0 : i32
      %c16_i32_7 = arith.constant 16 : i32
      %14 = arith.muli %c0_i32_6, %c16_i32_7 : i32
      %15 = tpu.assume_multiple %14, 16 : i32
      %16 = arith.index_cast %15 : i32 to index
      %c0 = arith.constant 0 : index
      %17 = vector.load %arg2[%16, %c0] : memref<16x128xf32, #tpu.memory_space<vmem>>, vector<16x128xf32>
      %18 = arith.index_cast %15 : i32 to index
      %c0_8 = arith.constant 0 : index
      %19 = vector.load %arg3[%18, %c0_8] : memref<16x128xf32, #tpu.memory_space<vmem>>, vector<16x128xf32>
      %20 = vector.shape_cast %17 : vector<16x128xf32> to vector<2x8x128xf32>
      %21 = vector.shape_cast %19 : vector<16x128xf32> to vector<2x8x128xf32>
      %cst_9 = arith.constant dense<0.000000e+00> : vector<8x128xf32>
      %22 = vector.multi_reduction <add>, %20, %cst_9 [0] : vector<2x8x128xf32> to vector<8x128xf32>
      %23 = arith.addf %13, %22 : vector<8x128xf32>
      %cst_10 = arith.constant dense<0.000000e+00> : vector<8x128xf32>
      %24 = vector.multi_reduction <add>, %21, %cst_10 [0] : vector<2x8x128xf32> to vector<8x128xf32>
      %25 = arith.addf %13, %24 : vector<8x128xf32>
      %26 = arith.mulf %20, %20 : vector<2x8x128xf32>
      %cst_11 = arith.constant dense<0.000000e+00> : vector<8x128xf32>
      %27 = vector.multi_reduction <add>, %26, %cst_11 [0] : vector<2x8x128xf32> to vector<8x128xf32>
      %28 = arith.addf %13, %27 : vector<8x128xf32>
      %29 = arith.mulf %21, %21 : vector<2x8x128xf32>
      %cst_12 = arith.constant dense<0.000000e+00> : vector<8x128xf32>
      %30 = vector.multi_reduction <add>, %29, %cst_12 [0] : vector<2x8x128xf32> to vector<8x128xf32>
      %31 = arith.addf %13, %30 : vector<8x128xf32>
      %32 = arith.mulf %20, %21 : vector<2x8x128xf32>
      %cst_13 = arith.constant dense<0.000000e+00> : vector<8x128xf32>
      %33 = vector.multi_reduction <add>, %32, %cst_13 [0] : vector<2x8x128xf32> to vector<8x128xf32>
      %34 = arith.addf %13, %33 : vector<8x128xf32>
      %c1_i32_14 = arith.constant 1 : i32
      %c0_15 = arith.constant 0 : index
      %c0_16 = arith.constant 0 : index
      %c0_17 = arith.constant 0 : index
      %c0_18 = arith.constant 0 : index
      %35 = vector.load %arg4[%c0_15, %c0_16, %c0_17, %c0_18] : memref<1x5x8x128xf32, #tpu.memory_space<vmem>>, vector<1x1x8x128xf32>
      %36 = vector.shape_cast %35 : vector<1x1x8x128xf32> to vector<8x128xf32>
      %37 = arith.addf %36, %23 : vector<8x128xf32>
      %c0_19 = arith.constant 0 : index
      %c0_20 = arith.constant 0 : index
      %c0_21 = arith.constant 0 : index
      %c0_22 = arith.constant 0 : index
      %38 = vector.load %arg4[%c0_19, %c0_20, %c0_21, %c0_22] : memref<1x5x8x128xf32, #tpu.memory_space<vmem>>, vector<1x1x8x128xf32>
      %39 = vector.shape_cast %38 : vector<1x1x8x128xf32> to vector<8x128xf32>
      %40 = vector.shape_cast %37 : vector<8x128xf32> to vector<1x1x8x128xf32>
      tpu.vector_store %arg4[%c0_19, %c0_20, %c0_21, %c0_22], %40 {strides = array<i32>} : memref<1x5x8x128xf32, #tpu.memory_space<vmem>>, vector<1x1x8x128xf32>,
      %c0_23 = arith.constant 0 : index
      %c1 = arith.constant 1 : index
      %c0_24 = arith.constant 0 : index
      %c0_25 = arith.constant 0 : index
      %41 = vector.load %arg4[%c0_23, %c1, %c0_24, %c0_25] : memref<1x5x8x128xf32, #tpu.memory_space<vmem>>, vector<1x1x8x128xf32>
      %42 = vector.shape_cast %41 : vector<1x1x8x128xf32> to vector<8x128xf32>
      %43 = arith.addf %42, %25 : vector<8x128xf32>
      %c0_26 = arith.constant 0 : index
      %c1_27 = arith.constant 1 : index
      %c0_28 = arith.constant 0 : index
      %c0_29 = arith.constant 0 : index
      %44 = vector.load %arg4[%c0_26, %c1_27, %c0_28, %c0_29] : memref<1x5x8x128xf32, #tpu.memory_space<vmem>>, vector<1x1x8x128xf32>
      %45 = vector.shape_cast %44 : vector<1x1x8x128xf32> to vector<8x128xf32>
      %46 = vector.shape_cast %43 : vector<8x128xf32> to vector<1x1x8x128xf32>
      tpu.vector_store %arg4[%c0_26, %c1_27, %c0_28, %c0_29], %46 {strides = array<i32>} : memref<1x5x8x128xf32, #tpu.memory_space<vmem>>, vector<1x1x8x128xf32>,
      %c0_30 = arith.constant 0 : index
      %c2 = arith.constant 2 : index
      %c0_31 = arith.constant 0 : index
      %c0_32 = arith.constant 0 : index
      %47 = vector.load %arg4[%c0_30, %c2, %c0_31, %c0_32] : memref<1x5x8x128xf32, #tpu.memory_space<vmem>>, vector<1x1x8x128xf32>
      %48 = vector.shape_cast %47 : vector<1x1x8x128xf32> to vector<8x128xf32>
      %49 = arith.addf %48, %28 : vector<8x128xf32>
      %c0_33 = arith.constant 0 : index
      %c2_34 = arith.constant 2 : index
      %c0_35 = arith.constant 0 : index
      %c0_36 = arith.constant 0 : index
      %50 = vector.load %arg4[%c0_33, %c2_34, %c0_35, %c0_36] : memref<1x5x8x128xf32, #tpu.memory_space<vmem>>, vector<1x1x8x128xf32>
      %51 = vector.shape_cast %50 : vector<1x1x8x128xf32> to vector<8x128xf32>
      %52 = vector.shape_cast %49 : vector<8x128xf32> to vector<1x1x8x128xf32>
      tpu.vector_store %arg4[%c0_33, %c2_34, %c0_35, %c0_36], %52 {strides = array<i32>} : memref<1x5x8x128xf32, #tpu.memory_space<vmem>>, vector<1x1x8x128xf32>,
      %c0_37 = arith.constant 0 : index
      %c3 = arith.constant 3 : index
      %c0_38 = arith.constant 0 : index
      %c0_39 = arith.constant 0 : index
      %53 = vector.load %arg4[%c0_37, %c3, %c0_38, %c0_39] : memref<1x5x8x128xf32, #tpu.memory_space<vmem>>, vector<1x1x8x128xf32>
      %54 = vector.shape_cast %53 : vector<1x1x8x128xf32> to vector<8x128xf32>
      %55 = arith.addf %54, %31 : vector<8x128xf32>
      %c0_40 = arith.constant 0 : index
      %c3_41 = arith.constant 3 : index
      %c0_42 = arith.constant 0 : index
      %c0_43 = arith.constant 0 : index
      %56 = vector.load %arg4[%c0_40, %c3_41, %c0_42, %c0_43] : memref<1x5x8x128xf32, #tpu.memory_space<vmem>>, vector<1x1x8x128xf32>
      %57 = vector.shape_cast %56 : vector<1x1x8x128xf32> to vector<8x128xf32>
      %58 = vector.shape_cast %55 : vector<8x128xf32> to vector<1x1x8x128xf32>
      tpu.vector_store %arg4[%c0_40, %c3_41, %c0_42, %c0_43], %58 {strides = array<i32>} : memref<1x5x8x128xf32, #tpu.memory_space<vmem>>, vector<1x1x8x128xf32>,
      %c0_44 = arith.constant 0 : index
      %c4 = arith.constant 4 : index
      %c0_45 = arith.constant 0 : index
      %c0_46 = arith.constant 0 : index
      %59 = vector.load %arg4[%c0_44, %c4, %c0_45, %c0_46] : memref<1x5x8x128xf32, #tpu.memory_space<vmem>>, vector<1x1x8x128xf32>
      %60 = vector.shape_cast %59 : vector<1x1x8x128xf32> to vector<8x128xf32>
      %61 = arith.addf %60, %34 : vector<8x128xf32>
      %c0_47 = arith.constant 0 : index
      %c4_48 = arith.constant 4 : index
      %c0_49 = arith.constant 0 : index
      %c0_50 = arith.constant 0 : index
      %62 = vector.load %arg4[%c0_47, %c4_48, %c0_49, %c0_50] : memref<1x5x8x128xf32, #tpu.memory_space<vmem>>, vector<1x1x8x128xf32>
      %63 = vector.shape_cast %62 : vector<1x1x8x128xf32> to vector<8x128xf32>
      %64 = vector.shape_cast %61 : vector<8x128xf32> to vector<1x1x8x128xf32>
      tpu.vector_store %arg4[%c0_47, %c4_48, %c0_49, %c0_50], %64 {strides = array<i32>} : memref<1x5x8x128xf32, #tpu.memory_space<vmem>>, vector<1x1x8x128xf32>,
    } else {
    }
    %c16_i32_4 = arith.constant 16 : i32
    %10 = arith.cmpi slt, %6, %c16_i32_4 : i32
    %11 = arith.extui %10 : i1 to i32
    %c0_i32_5 = arith.constant 0 : i32
    %12 = arith.cmpi ne, %11, %c0_i32_5 : i32
    scf.if %12 {
      %cst = arith.constant 0.000000e+00 : f32
      %13 = vector.broadcast %cst : f32 to vector<8x128xf32>
      %c0_i32_6 = arith.constant 0 : i32
      %c16_i32_7 = arith.constant 16 : i32
      %14 = arith.muli %c0_i32_6, %c16_i32_7 : i32
      %15 = tpu.assume_multiple %14, 16 : i32
      %16 = arith.index_cast %15 : i32 to index
      %c0 = arith.constant 0 : index
      %17 = vector.load %arg2[%16, %c0] : memref<16x128xf32, #tpu.memory_space<vmem>>, vector<16x128xf32>
      %18 = arith.index_cast %15 : i32 to index
      %c0_8 = arith.constant 0 : index
      %19 = vector.load %arg3[%18, %c0_8] : memref<16x128xf32, #tpu.memory_space<vmem>>, vector<16x128xf32>
      %20 = tpu.iota {dimensions = array<i32: 0>} : vector<16x128xi32>
      %21 = vector.broadcast %15 : i32 to vector<16x128xi32>
      %22 = arith.addi %20, %21 : vector<16x128xi32>
      %23 = vector.broadcast %6 : i32 to vector<16x128xi32>
      %24 = arith.cmpi slt, %22, %23 : vector<16x128xi32>
      %cst_9 = arith.constant 0.000000e+00 : f32
      %25 = vector.broadcast %cst_9 : f32 to vector<16x128xf32>
      %26 = arith.select %24, %17, %25 : vector<16x128xi1>, vector<16x128xf32>
      %cst_10 = arith.constant 0.000000e+00 : f32
      %27 = vector.broadcast %cst_10 : f32 to vector<16x128xf32>
      %28 = arith.select %24, %19, %27 : vector<16x128xi1>, vector<16x128xf32>
      %29 = vector.shape_cast %26 : vector<16x128xf32> to vector<2x8x128xf32>
      %30 = vector.shape_cast %28 : vector<16x128xf32> to vector<2x8x128xf32>
      %cst_11 = arith.constant dense<0.000000e+00> : vector<8x128xf32>
      %31 = vector.multi_reduction <add>, %29, %cst_11 [0] : vector<2x8x128xf32> to vector<8x128xf32>
      %32 = arith.addf %13, %31 : vector<8x128xf32>
      %cst_12 = arith.constant dense<0.000000e+00> : vector<8x128xf32>
      %33 = vector.multi_reduction <add>, %30, %cst_12 [0] : vector<2x8x128xf32> to vector<8x128xf32>
      %34 = arith.addf %13, %33 : vector<8x128xf32>
      %35 = arith.mulf %29, %29 : vector<2x8x128xf32>
      %cst_13 = arith.constant dense<0.000000e+00> : vector<8x128xf32>
      %36 = vector.multi_reduction <add>, %35, %cst_13 [0] : vector<2x8x128xf32> to vector<8x128xf32>
      %37 = arith.addf %13, %36 : vector<8x128xf32>
      %38 = arith.mulf %30, %30 : vector<2x8x128xf32>
      %cst_14 = arith.constant dense<0.000000e+00> : vector<8x128xf32>
      %39 = vector.multi_reduction <add>, %38, %cst_14 [0] : vector<2x8x128xf32> to vector<8x128xf32>
      %40 = arith.addf %13, %39 : vector<8x128xf32>
      %41 = arith.mulf %29, %30 : vector<2x8x128xf32>
      %cst_15 = arith.constant dense<0.000000e+00> : vector<8x128xf32>
      %42 = vector.multi_reduction <add>, %41, %cst_15 [0] : vector<2x8x128xf32> to vector<8x128xf32>
      %43 = arith.addf %13, %42 : vector<8x128xf32>
      %c1_i32_16 = arith.constant 1 : i32
      %c0_17 = arith.constant 0 : index
      %c0_18 = arith.constant 0 : index
      %c0_19 = arith.constant 0 : index
      %c0_20 = arith.constant 0 : index
      %44 = vector.load %arg4[%c0_17, %c0_18, %c0_19, %c0_20] : memref<1x5x8x128xf32, #tpu.memory_space<vmem>>, vector<1x1x8x128xf32>
      %45 = vector.shape_cast %44 : vector<1x1x8x128xf32> to vector<8x128xf32>
      %46 = arith.addf %45, %32 : vector<8x128xf32>
      %c0_21 = arith.constant 0 : index
      %c0_22 = arith.constant 0 : index
      %c0_23 = arith.constant 0 : index
      %c0_24 = arith.constant 0 : index
      %47 = vector.load %arg4[%c0_21, %c0_22, %c0_23, %c0_24] : memref<1x5x8x128xf32, #tpu.memory_space<vmem>>, vector<1x1x8x128xf32>
      %48 = vector.shape_cast %47 : vector<1x1x8x128xf32> to vector<8x128xf32>
      %49 = vector.shape_cast %46 : vector<8x128xf32> to vector<1x1x8x128xf32>
      tpu.vector_store %arg4[%c0_21, %c0_22, %c0_23, %c0_24], %49 {strides = array<i32>} : memref<1x5x8x128xf32, #tpu.memory_space<vmem>>, vector<1x1x8x128xf32>,
      %c0_25 = arith.constant 0 : index
      %c1 = arith.constant 1 : index
      %c0_26 = arith.constant 0 : index
      %c0_27 = arith.constant 0 : index
      %50 = vector.load %arg4[%c0_25, %c1, %c0_26, %c0_27] : memref<1x5x8x128xf32, #tpu.memory_space<vmem>>, vector<1x1x8x128xf32>
      %51 = vector.shape_cast %50 : vector<1x1x8x128xf32> to vector<8x128xf32>
      %52 = arith.addf %51, %34 : vector<8x128xf32>
      %c0_28 = arith.constant 0 : index
      %c1_29 = arith.constant 1 : index
      %c0_30 = arith.constant 0 : index
      %c0_31 = arith.constant 0 : index
      %53 = vector.load %arg4[%c0_28, %c1_29, %c0_30, %c0_31] : memref<1x5x8x128xf32, #tpu.memory_space<vmem>>, vector<1x1x8x128xf32>
      %54 = vector.shape_cast %53 : vector<1x1x8x128xf32> to vector<8x128xf32>
      %55 = vector.shape_cast %52 : vector<8x128xf32> to vector<1x1x8x128xf32>
      tpu.vector_store %arg4[%c0_28, %c1_29, %c0_30, %c0_31], %55 {strides = array<i32>} : memref<1x5x8x128xf32, #tpu.memory_space<vmem>>, vector<1x1x8x128xf32>,
      %c0_32 = arith.constant 0 : index
      %c2 = arith.constant 2 : index
      %c0_33 = arith.constant 0 : index
      %c0_34 = arith.constant 0 : index
      %56 = vector.load %arg4[%c0_32, %c2, %c0_33, %c0_34] : memref<1x5x8x128xf32, #tpu.memory_space<vmem>>, vector<1x1x8x128xf32>
      %57 = vector.shape_cast %56 : vector<1x1x8x128xf32> to vector<8x128xf32>
      %58 = arith.addf %57, %37 : vector<8x128xf32>
      %c0_35 = arith.constant 0 : index
      %c2_36 = arith.constant 2 : index
      %c0_37 = arith.constant 0 : index
      %c0_38 = arith.constant 0 : index
      %59 = vector.load %arg4[%c0_35, %c2_36, %c0_37, %c0_38] : memref<1x5x8x128xf32, #tpu.memory_space<vmem>>, vector<1x1x8x128xf32>
      %60 = vector.shape_cast %59 : vector<1x1x8x128xf32> to vector<8x128xf32>
      %61 = vector.shape_cast %58 : vector<8x128xf32> to vector<1x1x8x128xf32>
      tpu.vector_store %arg4[%c0_35, %c2_36, %c0_37, %c0_38], %61 {strides = array<i32>} : memref<1x5x8x128xf32, #tpu.memory_space<vmem>>, vector<1x1x8x128xf32>,
      %c0_39 = arith.constant 0 : index
      %c3 = arith.constant 3 : index
      %c0_40 = arith.constant 0 : index
      %c0_41 = arith.constant 0 : index
      %62 = vector.load %arg4[%c0_39, %c3, %c0_40, %c0_41] : memref<1x5x8x128xf32, #tpu.memory_space<vmem>>, vector<1x1x8x128xf32>
      %63 = vector.shape_cast %62 : vector<1x1x8x128xf32> to vector<8x128xf32>
      %64 = arith.addf %63, %40 : vector<8x128xf32>
      %c0_42 = arith.constant 0 : index
      %c3_43 = arith.constant 3 : index
      %c0_44 = arith.constant 0 : index
      %c0_45 = arith.constant 0 : index
      %65 = vector.load %arg4[%c0_42, %c3_43, %c0_44, %c0_45] : memref<1x5x8x128xf32, #tpu.memory_space<vmem>>, vector<1x1x8x128xf32>
      %66 = vector.shape_cast %65 : vector<1x1x8x128xf32> to vector<8x128xf32>
      %67 = vector.shape_cast %64 : vector<8x128xf32> to vector<1x1x8x128xf32>
      tpu.vector_store %arg4[%c0_42, %c3_43, %c0_44, %c0_45], %67 {strides = array<i32>} : memref<1x5x8x128xf32, #tpu.memory_space<vmem>>, vector<1x1x8x128xf32>,
      %c0_46 = arith.constant 0 : index
      %c4 = arith.constant 4 : index
      %c0_47 = arith.constant 0 : index
      %c0_48 = arith.constant 0 : index
      %68 = vector.load %arg4[%c0_46, %c4, %c0_47, %c0_48] : memref<1x5x8x128xf32, #tpu.memory_space<vmem>>, vector<1x1x8x128xf32>
      %69 = vector.shape_cast %68 : vector<1x1x8x128xf32> to vector<8x128xf32>
      %70 = arith.addf %69, %43 : vector<8x128xf32>
      %c0_49 = arith.constant 0 : index
      %c4_50 = arith.constant 4 : index
      %c0_51 = arith.constant 0 : index
      %c0_52 = arith.constant 0 : index
      %71 = vector.load %arg4[%c0_49, %c4_50, %c0_51, %c0_52] : memref<1x5x8x128xf32, #tpu.memory_space<vmem>>, vector<1x1x8x128xf32>
      %72 = vector.shape_cast %71 : vector<1x1x8x128xf32> to vector<8x128xf32>
      %73 = vector.shape_cast %70 : vector<8x128xf32> to vector<1x1x8x128xf32>
      tpu.vector_store %arg4[%c0_49, %c4_50, %c0_51, %c0_52], %73 {strides = array<i32>} : memref<1x5x8x128xf32, #tpu.memory_space<vmem>>, vector<1x1x8x128xf32>,
    } else {
    }
    return
  }
  func.func @transform_0(%arg0: i32, %arg1: i32) -> (i32, i32) {
    %c1_i32 = arith.constant 1 : i32
    %0 = arith.muli %arg0, %c1_i32 : i32
    %1 = arith.addi %0, %arg1 : i32
    %c0_i32 = arith.constant 0 : i32
    %c0_i32_0 = arith.constant 0 : i32
    return %1, %c0_i32 : i32, i32
  }
  func.func @transform_1(%arg0: i32, %arg1: i32) -> (i32, i32) {
    %c1_i32 = arith.constant 1 : i32
    %0 = arith.muli %arg0, %c1_i32 : i32
    %1 = arith.addi %0, %arg1 : i32
    %c0_i32 = arith.constant 0 : i32
    %c0_i32_0 = arith.constant 0 : i32
    return %1, %c0_i32 : i32, i32
  }
  func.func @transform_2(%arg0: i32, %arg1: i32) -> (i32, i32, i32, i32) {
    %c0_i32 = arith.constant 0 : i32
    %c0_i32_0 = arith.constant 0 : i32
    %c0_i32_1 = arith.constant 0 : i32
    %c0_i32_2 = arith.constant 0 : i32
    return %arg0, %c0_i32, %c0_i32_0, %c0_i32_1 : i32, i32, i32, i32
  }
}

</mosaic_0001>

<llo_original>
// kernel: tpu_custom_call.1
$region0: #{tpu_custom_call.1}
  #allocation0 [shape = 'u32[]', space=smem, size = 0x4, offset = 0x4, fixed_abs, tag = 'smem constant byte address 0x4 - core index']
  #allocation1 [shape = 'u32[72,128]{1,0:T(1,128)}', space=vmem, size = 0x9000, scoped, tag = 'internal scratch']
  %s0 = inlined_call_operand.hbm [shape: f32[16,128], index: 0, kind: input, shape index: {}]
  %s1 = inlined_call_operand.hbm [shape: f32[16,128], index: 1, kind: input, shape index: {}]
  %s2 = inlined_call_operand.hbm [shape: f32[1,5,8,128], index: 2, kind: output, shape index: {}]
  %s3 = sld [smem:[#allocation0]]
  $region38: #{tpu_custom_call.1} parent=0
    _
  %s5 = ssub.s32 1, %s3
  %s6 = scalar_select 0, %s5, %s3
  $region1: #{tpu_custom_call.1} parent=0
    #allocation2 [shape = 'u8[8192]{0}', space=vmem, size = 0x2000, scoped, tag = 'input window, operand 0, single buffered']
    #allocation3 [shape = 's32[1]{0}', space=sflag, size = 0x4, scoped, tag = 'scoped memory for tpu_custom_call.1']
    #allocation4 [shape = 's32[1]{0}', space=sflag, size = 0x4, scoped, tag = 'scoped memory for tpu_custom_call.1']
    #allocation5 [shape = 'u8[8192]{0}', space=vmem, size = 0x2000, scoped, tag = 'input window, operand 1, single buffered']
    #allocation6 [shape = 's32[1]{0}', space=sflag, size = 0x4, scoped, tag = 'scoped memory for tpu_custom_call.1']
    #allocation7 [shape = 'u8[20480]{0}', space=vmem, size = 0x5000, scoped, tag = 'output window, operand 0, single buffered']
    %7 = vsyncpa [#allocation3], 0
    %8 = vsyncpa [#allocation6], 0
    %9 = vsyncpa [#allocation4], 0
    // Predicated region
    $region2: #{tpu_custom_call.1} parent=1 // pred_check
      _
    $region3: #{tpu_custom_call.1} parent=1 // pred_check_branch
      %11 = sbr.rel (0) target = $region5
    $region4: #{tpu_custom_call.1} parent=1 // pred_region
      %s12 = sadd.s32 0, 0
      %s13 = smul.u32 2, %s12
      %15 = vsyncadd [#allocation3], 0
      %s16 = smul.addr %s13, 8
      %s17 = scalar_lea.hbm %s0, %s16
      %s18 = sshll.u32 %s17, 4
      %s19 = int_to_ptr.hbm [resolvable:$true] %s18
      %s20 = sshll.u32 [#allocation2], 4
      %s21 = int_to_ptr.vmem [resolvable:$true] %s20
      %26 = dma.hbm_to_vmem [thread:$0]  %s19, 256, %s21, [#allocation3], 128, 128, 8
    $region5: #{tpu_custom_call.1} parent=1 // pred_fallthru
      _
    // Predicated region
    $region6: #{tpu_custom_call.1} parent=1 // pred_check
      _
    $region7: #{tpu_custom_call.1} parent=1 // pred_check_branch
      %28 = sbr.rel (0) target = $region9
    $region8: #{tpu_custom_call.1} parent=1 // pred_region
      %s29 = sadd.s32 0, 0
      %s30 = smul.u32 2, %s29
      %32 = vsyncadd [#allocation6], 0
      %s33 = smul.addr %s30, 8
      %s34 = scalar_lea.hbm %s1, %s33
      %s35 = sshll.u32 %s34, 4
      %s36 = int_to_ptr.hbm [resolvable:$true] %s35
      %s37 = sshll.u32 [#allocation5], 4
      %s38 = int_to_ptr.vmem [resolvable:$true] %s37
      %43 = dma.hbm_to_vmem [thread:$0]  %s36, 256, %s38, [#allocation6], 128, 128, 8
    $region9: #{tpu_custom_call.1} parent=1 // pred_fallthru
      _
    // Predicated region
    $region10: #{tpu_custom_call.1} parent=1 // pred_check
      _
    $region11: #{tpu_custom_call.1} parent=1 // pred_check_branch
      %45 = sbr.rel (0) target = $region13
    $region12: #{tpu_custom_call.1} parent=1 // pred_region
      %47 = dma.done [#allocation3], 256
    $region13: #{tpu_custom_call.1} parent=1 // pred_fallthru
      _
    // Predicated region
    $region14: #{tpu_custom_call.1} parent=1 // pred_check
      _
    $region15: #{tpu_custom_call.1} parent=1 // pred_check_branch
      %49 = sbr.rel (0) target = $region17
    $region16: #{tpu_custom_call.1} parent=1 // pred_region
      %51 = dma.done [#allocation6], 256
    $region17: #{tpu_custom_call.1} parent=1 // pred_fallthru
      _
    %s52 = sadd.s32 0, 0
    %s53 = smul.u32 2, %s52
    %s54 = sadd.s32 0, 0
    %s55 = smul.u32 2, %s54
    %p56 = scmp.eq.s32.totalorder 0, 0
    // Predicated region
    $region18: #{tpu_custom_call.1} parent=1 // pred_check
      %p57 = pneg %p56
    $region19: #{tpu_custom_call.1} parent=1 // pred_check_branch
      %59 = sbr.rel (%p57) target = $region21
    $region20: #{tpu_custom_call.1} parent=1 // pred_region
      %60 = vst [vmem:[#allocation7] sm:$0xff] 0.0
      %61 = vst [vmem:[#allocation7 + $0x8] sm:$0xff] 0.0
      %62 = vst [vmem:[#allocation7 + $0x10] sm:$0xff] 0.0
      %63 = vst [vmem:[#allocation7 + $0x18] sm:$0xff] 0.0
      %64 = vst [vmem:[#allocation7 + $0x20] sm:$0xff] 0.0
    $region21: #{tpu_custom_call.1} parent=1 // pred_fallthru
      _
    %s65 = sadd.s32 0, 0
    %s66 = smul.u32 %s65, 16
    %s67 = ssub.s32 16, %s66
    %p68 = scmp.ge.s32.totalorder %s67, 16
    // Predicated region
    $region22: #{tpu_custom_call.1} parent=1 // pred_check
      %p69 = pneg %p68
    $region23: #{tpu_custom_call.1} parent=1 // pred_check_branch
      %71 = sbr.rel (%p69) target = $region25
    $region24: #{tpu_custom_call.1} parent=1 // pred_region
      %v72 = vld [vmem:[#allocation2] sm:$0xff]
      %v73 = vld [vmem:[#allocation2 + $0x8] sm:$0xff]
      %v74 = vld [vmem:[#allocation5] sm:$0xff]
      %v75 = vld [vmem:[#allocation5 + $0x8] sm:$0xff]
      %v76 = vadd.f32 %v72, %v73
      %v77 = vadd.f32 %v76, 0.0
      %v78 = vadd.f32 %v74, %v75
      %v79 = vadd.f32 %v78, 0.0
      %v80 = vmul.f32 %v72, %v72
      %v81 = vmul.f32 %v73, %v73
      %v82 = vadd.f32 %v80, %v81
      %v83 = vadd.f32 %v82, 0.0
      %v84 = vmul.f32 %v74, %v74
      %v85 = vmul.f32 %v75, %v75
      %v86 = vadd.f32 %v84, %v85
      %v87 = vadd.f32 %v86, 0.0
      %v88 = vmul.f32 %v72, %v74
      %v89 = vmul.f32 %v73, %v75
      %v90 = vadd.f32 %v88, %v89
      %v91 = vadd.f32 %v90, 0.0
      %v92 = vld [vmem:[#allocation7] sm:$0xff]
      %v93 = vadd.f32 %v92, %v77
      %94 = vst [vmem:[#allocation7] sm:$0xff] %v93
      %s95 = scalar_lea.vmem [#allocation7], 8
      %v96 = vld [vmem:[%s95] sm:$0xff]
      %v97 = vadd.f32 %v96, %v79
      %98 = vst [vmem:[%s95] sm:$0xff] %v97
      %s99 = scalar_lea.vmem [#allocation7], 16
      %v100 = vld [vmem:[%s99] sm:$0xff]
      %v101 = vadd.f32 %v100, %v83
      %102 = vst [vmem:[%s99] sm:$0xff] %v101
      %s103 = scalar_lea.vmem [#allocation7], 24
      %v104 = vld [vmem:[%s103] sm:$0xff]
      %v105 = vadd.f32 %v104, %v87
      %106 = vst [vmem:[%s103] sm:$0xff] %v105
      %s107 = scalar_lea.vmem [#allocation7], 32
      %v108 = vld [vmem:[%s107] sm:$0xff]
      %v109 = vadd.f32 %v108, %v91
      %110 = vst [vmem:[%s107] sm:$0xff] %v109
    $region25: #{tpu_custom_call.1} parent=1 // pred_fallthru
      _
    %p111 = scmp.lt.s32.totalorder %s67, 16
    // Predicated region
    $region26: #{tpu_custom_call.1} parent=1 // pred_check
      %p112 = pneg %p111
    $region27: #{tpu_custom_call.1} parent=1 // pred_check_branch
      %114 = sbr.rel (%p112) target = $region29
    $region28: #{tpu_custom_call.1} parent=1 // pred_region
      %v115 = vld [vmem:[#allocation2] sm:$0xff]
      %v116 = vld [vmem:[#allocation2 + $0x8] sm:$0xff]
      %v117 = vld [vmem:[#allocation5] sm:$0xff]
      %v118 = vld [vmem:[#allocation5 + $0x8] sm:$0xff]
      %v119 = vlaneseq
      %v120 = vshrl.u32 %v119, 7
      %v121 = vadd.s32 %v120, 8
      %v122 = vstv 0
      %v123 = vadd.s32 %v120, %v122
      %v124 = vadd.s32 %v121, %v122
      %v125 = vstv %s67
      %vm126 = vcmp.lt.s32.totalorder %v123, %v125
      %vm127 = vcmp.lt.s32.totalorder %v124, %v125
      %v128 = vsel %vm126, %v115, 0.0
      %v129 = vsel %vm127, %v116, 0.0
      %v130 = vsel %vm126, %v117, 0.0
      %v131 = vsel %vm127, %v118, 0.0
      %v132 = vadd.f32 %v128, %v129
      %v133 = vadd.f32 %v132, 0.0
      %v134 = vadd.f32 %v130, %v131
      %v135 = vadd.f32 %v134, 0.0
      %v136 = vmul.f32 %v128, %v128
      %v137 = vmul.f32 %v129, %v129
      %v138 = vadd.f32 %v136, %v137
      %v139 = vadd.f32 %v138, 0.0
      %v140 = vmul.f32 %v130, %v130
      %v141 = vmul.f32 %v131, %v131
      %v142 = vadd.f32 %v140, %v141
      %v143 = vadd.f32 %v142, 0.0
      %v144 = vmul.f32 %v128, %v130
      %v145 = vmul.f32 %v129, %v131
      %v146 = vadd.f32 %v144, %v145
      %v147 = vadd.f32 %v146, 0.0
      %v148 = vld [vmem:[#allocation7] sm:$0xff]
      %v149 = vadd.f32 %v148, %v133
      %150 = vst [vmem:[#allocation7] sm:$0xff] %v149
      %s151 = scalar_lea.vmem [#allocation7], 8
      %v152 = vld [vmem:[%s151] sm:$0xff]
      %v153 = vadd.f32 %v152, %v135
      %154 = vst [vmem:[%s151] sm:$0xff] %v153
      %s155 = scalar_lea.vmem [#allocation7], 16
      %v156 = vld [vmem:[%s155] sm:$0xff]
      %v157 = vadd.f32 %v156, %v139
      %158 = vst [vmem:[%s155] sm:$0xff] %v157
      %s159 = scalar_lea.vmem [#allocation7], 24
      %v160 = vld [vmem:[%s159] sm:$0xff]
      %v161 = vadd.f32 %v160, %v143
      %162 = vst [vmem:[%s159] sm:$0xff] %v161
      %s163 = scalar_lea.vmem [#allocation7], 32
      %v164 = vld [vmem:[%s163] sm:$0xff]
      %v165 = vadd.f32 %v164, %v147
      %166 = vst [vmem:[%s163] sm:$0xff] %v165
    $region29: #{tpu_custom_call.1} parent=1 // pred_fallthru
      _
    // Predicated region
    $region30: #{tpu_custom_call.1} parent=1 // pred_check
      _
    $region31: #{tpu_custom_call.1} parent=1 // pred_check_branch
      %168 = sbr.rel (0) target = $region33
    $region32: #{tpu_custom_call.1} parent=1 // pred_region
      %170 = vsyncadd [#allocation4], 0
      %s171 = sshll.u32 [#allocation7], 4
      %s172 = int_to_ptr.vmem [resolvable:$true] %s171
      %s173 = sshll.u32 %s2, 4
      %s174 = int_to_ptr.hbm [resolvable:$true] %s173
      %179 = dma.vmem_to_hbm [thread:$0]  %s172, 640, %s174, [#allocation4], 128, 128, 8
    $region33: #{tpu_custom_call.1} parent=1 // pred_fallthru
      _
    // Predicated region
    $region34: #{tpu_custom_call.1} parent=1 // pred_check
      _
    $region35: #{tpu_custom_call.1} parent=1 // pred_check_branch
      %181 = sbr.rel (0) target = $region37
    $region36: #{tpu_custom_call.1} parent=1 // pred_region
      %183 = dma.done [#allocation4], 640
    $region37: #{tpu_custom_call.1} parent=1 // pred_fallthru
      _
    %184 = vsyncpa [#allocation3], 1
    %185 = vsyncpa [#allocation6], 1
    %186 = vsyncpa [#allocation4], 1

</llo_original>
